<compile_context>
chip_gen: v6e
topology: v6e:2x2x1
jax: 0.10.0
libtpu: 0.0.40
codegen_flags: <defaults>
</compile_context>

<pallas_src>
import functools

import jax
import jax.numpy as jnp
from jax.experimental import pallas as pl
from jax.experimental.pallas import tpu as pltpu

_SUBLANE = 8  # f32 sublane granularity for the second-to-last block dim


def _round_up(x, m):
    return ((x + m - 1) // m) * m


def _mlp_kernel(x_ref, w1t_ref, w2t_ref, o_ref):
    # x_ref:   (bt, n_input)        activation tile for this grid step
    # w1t_ref: (n_input, n_hidden)  W1^T, VMEM-resident across all grid steps
    # w2t_ref: (n_hidden, n_output) W2^T, VMEM-resident across all grid steps
    # o_ref:   (bt, n_output)       narrow (unpadded) output tile
    x = x_ref[...]
    h = jnp.dot(x, w1t_ref[...], preferred_element_type=jnp.float32)    # MXU
    h = jnp.maximum(h, 0.0)                                             # ReLU (VPU, f32)
    y = jnp.dot(h.astype(w2t_ref.dtype), w2t_ref[...],
                preferred_element_type=jnp.float32)                     # MXU
    o_ref[...] = jnp.tanh(y).astype(o_ref.dtype)                        # Tanh (EUP, f32)


@functools.partial(jax.jit, static_argnames=("batch_tile", "use_bf16"))
def neural_network_forward(state, w1, w2, *, batch_tile=4096, use_bf16=False):
    """Pallas equivalent of NeuralNetwork.forward(state).

    state: (batch, n_input) float32
    w1:    (n_hidden, n_input) float32   -- NN[0].weight (PyTorch layout)
    w2:    (n_output, n_hidden) float32  -- NN[2].weight (PyTorch layout)
    returns: (batch, n_output) float32
    """
    state = jnp.asarray(state, dtype=jnp.float32)
    w1 = jnp.asarray(w1, dtype=jnp.float32)
    w2 = jnp.asarray(w2, dtype=jnp.float32)
    batch, n_input = state.shape
    n_hidden = w1.shape[0]
    n_output = w2.shape[0]

    # One-time, tiny pre-transposes (fused / constant-folded under jit) so the
    # kernel does plain jnp.dot with no in-kernel transpose.
    w1t = w1.T  # (n_input, n_hidden)
    w2t = w2.T  # (n_hidden, n_output)

    in_dtype = jnp.bfloat16 if use_bf16 else jnp.float32
    x = state.astype(in_dtype)
    w1t = w1t.astype(in_dtype)
    w2t = w2t.astype(in_dtype)

    # Batch tile: big (amortize per-grid-step overhead), but capped at
    # ceil(batch/2) rounded to a sublane multiple so the parallel axis has at
    # least 2 tiles (v7x has 2 TensorCores).  Tiny batches use a single block
    # equal to the full batch dim (legal even when not a multiple of 8).
    if batch <= _SUBLANE:
        bt = batch
    else:
        half = _round_up((batch + 1) // 2, _SUBLANE)
        bt = min(batch_tile, half)
    grid = (pl.cdiv(batch, bt),)

    itemsize = jnp.dtype(in_dtype).itemsize
    cost = pl.CostEstimate(
        flops=2 * batch * (n_input * n_hidden + n_hidden * n_output),
        transcendentals=batch * n_output,
        bytes_accessed=itemsize * (batch * n_input
                                   + n_input * n_hidden
                                   + n_hidden * n_output)
                       + 4 * batch * n_output,
    )

    out = pl.pallas_call(
        _mlp_kernel,
        out_shape=jax.ShapeDtypeStruct((batch, n_output), jnp.float32),
        grid=grid,
        in_specs=[
            # Activations: tiled along the batch grid axis, feature dim kept
            # at its true (narrow) width -- no HBM padding traffic.
            pl.BlockSpec((bt, n_input), lambda i: (i, 0)),
            # Weights: same block every grid step -> stay VMEM-resident.
            pl.BlockSpec((n_input, n_hidden), lambda i: (0, 0)),
            pl.BlockSpec((n_hidden, n_output), lambda i: (0, 0)),
        ],
        # Narrow output block (full last dim): ~32x fewer output bytes than a
        # 128-lane slab for n_output=4, no post-kernel slice pass.
        out_specs=pl.BlockSpec((bt, n_output), lambda i: (i, 0)),
        compiler_params=pltpu.CompilerParams(
            dimension_semantics=("parallel",)),
        cost_estimate=cost,
    )(x, w1t, w2t)

    return out


def make_weights(n_input, n_hidden, n_output, key):
    """Deterministic flat weight vector, split like NeuralNetwork.set_weights."""
    n_con1 = n_input * n_hidden
    n_con2 = n_hidden * n_output
    flat = jax.random.normal(key, (n_con1 + n_con2,), dtype=jnp.float32) * 0.1
    w1 = flat[:n_con1].reshape(n_hidden, n_input)    # NN[0].weight shape
    w2 = flat[-n_con2:].reshape(n_output, n_hidden)  # NN[2].weight shape
    return w1, w2


if __name__ == "__main__":
    key = jax.random.PRNGKey(0)
    k_x, k_w, k_x2 = jax.random.split(key, 3)

    # Small controller-sized network (matches the module's intended use).
    batch, n_input, n_hidden, n_output = 2, 8, 32, 4
    state = jax.random.normal(k_x, (batch, n_input), dtype=jnp.float32)
    w1, w2 = make_weights(n_input, n_hidden, n_output, k_w)

    out = neural_network_forward(state, w1, w2)
    out = jax.block_until_ready(out)
    ref = jnp.tanh(jnp.maximum(state @ w1.T, 0.0) @ w2.T)
    assert out.shape == (batch, n_output)
    assert jnp.allclose(out, ref, atol=1e-5, rtol=1e-5)

    # Larger batch (many controller evaluations amortized into one call);
    # exercises 2 parallel grid tiles + a partial (OOB-masked) final tile.
    big_batch = 1000
    state_big = jax.random.normal(k_x2, (big_batch, n_input), dtype=jnp.float32)
    out_big = neural_network_forward(state_big, w1, w2)
    out_big = jax.block_until_ready(out_big)
    ref_big = jnp.tanh(jnp.maximum(state_big @ w1.T, 0.0) @ w2.T)
    assert out_big.shape == (big_batch, n_output)
    assert jnp.allclose(out_big, ref_big, atol=1e-5, rtol=1e-5)

    print("KERNEL_OK")
</pallas_src>

<mosaic_0001>
module attributes {stable_mosaic.version = 11 : i64} {
  func.func @_mlp_kernel(%arg0: i32, %arg1: memref<2x8xf32, #tpu.memory_space<vmem>>, %arg2: memref<8x32xf32, #tpu.memory_space<vmem>>, %arg3: memref<32x4xf32, #tpu.memory_space<vmem>>, %arg4: memref<2x4xf32, #tpu.memory_space<vmem>>) attributes {dimension_semantics = [#tpu.dimension_semantics<parallel>], iteration_bounds = array<i64: 1>, scalar_prefetch = 0 : i64, scratch_operands = 0 : i64, tpu.core_type = #tpu.core_type<tc>, window_params = [{transform_indices = @transform_0, window_bounds = array<i64: 2, 8>}, {pipeline_mode = #tpu.pipeline_mode<synchronous>, transform_indices = @transform_1, window_bounds = array<i64: 8, 32>}, {pipeline_mode = #tpu.pipeline_mode<synchronous>, transform_indices = @transform_2, window_bounds = array<i64: 32, 4>}, {transform_indices = @transform_3, window_bounds = array<i64: 2, 4>}]} {
    %c0 = arith.constant 0 : index
    %c0_0 = arith.constant 0 : index
    %0 = vector.load %arg1[%c0, %c0_0] : memref<2x8xf32, #tpu.memory_space<vmem>>, vector<2x8xf32>
    %c0_1 = arith.constant 0 : index
    %c0_2 = arith.constant 0 : index
    %1 = vector.load %arg2[%c0_1, %c0_2] : memref<8x32xf32, #tpu.memory_space<vmem>>, vector<8x32xf32>
    %cst = arith.constant dense<0.000000e+00> : vector<2x32xf32>
    %2 = tpu.matmul %0, %1, %cst {dimension_numbers = #tpu.dot_dimension_numbers<[1], [0], [0], [1], [0, 0, 1, 1], [], []>} : vector<2x8xf32>, vector<8x32xf32>, vector<2x32xf32> -> vector<2x32xf32>
    %cst_3 = arith.constant 0.000000e+00 : f32
    %3 = vector.broadcast %cst_3 : f32 to vector<2x32xf32>
    %4 = arith.maximumf %2, %3 : vector<2x32xf32>
    %c0_4 = arith.constant 0 : index
    %c0_5 = arith.constant 0 : index
    %5 = vector.load %arg3[%c0_4, %c0_5] : memref<32x4xf32, #tpu.memory_space<vmem>>, vector<32x4xf32>
    %cst_6 = arith.constant dense<0.000000e+00> : vector<2x4xf32>
    %6 = tpu.matmul %4, %5, %cst_6 {dimension_numbers = #tpu.dot_dimension_numbers<[1], [0], [0], [1], [0, 0, 1, 1], [], []>} : vector<2x32xf32>, vector<32x4xf32>, vector<2x4xf32> -> vector<2x4xf32>
    %7 = math.tanh %6 : vector<2x4xf32>
    %c0_7 = arith.constant 0 : index
    %c0_8 = arith.constant 0 : index
    %8 = vector.load %arg4[%c0_7, %c0_8] : memref<2x4xf32, #tpu.memory_space<vmem>>, vector<2x4xf32>
    tpu.vector_store %arg4[%c0_7, %c0_8], %7 {strides = array<i32>} : memref<2x4xf32, #tpu.memory_space<vmem>>, vector<2x4xf32>,
    return
  }
  func.func @transform_0(%arg0: i32) -> (i32, i32) {
    %c0_i32 = arith.constant 0 : i32
    %c0_i32_0 = arith.constant 0 : i32
    return %arg0, %c0_i32 : i32, i32
  }
  func.func @transform_1(%arg0: i32) -> (i32, i32) {
    %c0_i32 = arith.constant 0 : i32
    %c0_i32_0 = arith.constant 0 : i32
    %c0_i32_1 = arith.constant 0 : i32
    return %c0_i32, %c0_i32_0 : i32, i32
  }
  func.func @transform_2(%arg0: i32) -> (i32, i32) {
    %c0_i32 = arith.constant 0 : i32
    %c0_i32_0 = arith.constant 0 : i32
    %c0_i32_1 = arith.constant 0 : i32
    return %c0_i32, %c0_i32_0 : i32, i32
  }
  func.func @transform_3(%arg0: i32) -> (i32, i32) {
    %c0_i32 = arith.constant 0 : i32
    %c0_i32_0 = arith.constant 0 : i32
    return %arg0, %c0_i32 : i32, i32
  }
}

</mosaic_0001>

<llo_original>
// kernel: neural_network_forward.1
$region0: #{neural_network_forward.1}
  #allocation0 [shape = 'u32[]', space=smem, size = 0x4, offset = 0x4, fixed_abs, tag = 'smem constant byte address 0x4 - core index']
  #allocation1 [shape = 'u32[144,128]{1,0:T(1,128)}', space=vmem, size = 0x12000, scoped, tag = 'internal scratch']
  %s0 = inlined_call_operand.vmem [shape: f32[2,8], index: 0, kind: input, shape index: {}]
  %s1 = inlined_call_operand.vmem [shape: f32[8,32], index: 1, kind: input, shape index: {}]
  %s2 = inlined_call_operand.vmem [shape: f32[32,4], index: 2, kind: input, shape index: {}]
  %s3 = inlined_call_operand.hbm [shape: f32[2,4], index: 3, kind: output, shape index: {}]
  %s4 = sld [smem:[#allocation0]]
  $region22: #{neural_network_forward.1} parent=0
    _
  %s6 = ssub.s32 1, %s4
  %s7 = scalar_select 0, %s6, %s4
  $region1: #{neural_network_forward.1} parent=0
    #allocation2 [shape = 'u8[1024]{0}', space=vmem, size = 0x400, scoped, tag = 'output window, operand 0, single buffered']
    #allocation3 [shape = 's32[1]{0}', space=sflag, size = 0x4, scoped, tag = 'scoped memory for neural_network_forward.1']
    %8 = vsyncpa [#allocation3], 0
    // Predicated region
    $region2: #{neural_network_forward.1} parent=1 // pred_check
      _
    $region3: #{neural_network_forward.1} parent=1 // pred_check_branch
      %10 = sbr.rel (0) target = $region5
    $region4: #{neural_network_forward.1} parent=1 // pred_region
      _
    $region5: #{neural_network_forward.1} parent=1 // pred_fallthru
      _
    // Predicated region
    $region6: #{neural_network_forward.1} parent=1 // pred_check
      _
    $region7: #{neural_network_forward.1} parent=1 // pred_check_branch
      %12 = sbr.rel (0) target = $region9
    $region8: #{neural_network_forward.1} parent=1 // pred_region
      _
    $region9: #{neural_network_forward.1} parent=1 // pred_fallthru
      _
    // Predicated region
    $region10: #{neural_network_forward.1} parent=1 // pred_check
      _
    $region11: #{neural_network_forward.1} parent=1 // pred_check_branch
      %14 = sbr.rel (0) target = $region13
    $region12: #{neural_network_forward.1} parent=1 // pred_region
      _
    $region13: #{neural_network_forward.1} parent=1 // pred_fallthru
      _
    %v15 = vld [vmem:[%s0] sm:$0x3]
    %v16 = vld [vmem:[%s1] sm:$0xff]
    %vm17 = vcmask 64512
    %v19 = vsel %vm17, %v15, 0
    %21 = vmatprep.subr.mxu0 0.0
    %22 = vmatpush1.msra.mxu0 0.0
    %23 = vmatprep.subr.mxu0 0.0
    %24 = vmatpush1.msra.mxu0 0.0
    %25 = vmatprep.subr.mxu0 0.0
    %26 = vmatpush1.msra.mxu0 0.0
    %27 = vmatprep.subr.mxu0 0.0
    %28 = vmatpush1.msra.mxu0 0.0
    %29 = vmatprep.subr.mxu0 0.0
    %30 = vmatpush1.msra.mxu0 0.0
    %31 = vmatprep.subr.mxu0 0.0
    %32 = vmatpush1.msra.mxu0 0.0
    %33 = vmatprep.subr.mxu0 0.0
    %34 = vmatpush1.msra.mxu0 0.0
    %35 = vmatprep.subr.mxu0 0.0
    %36 = vmatpush1.msra.mxu0 0.0
    %37 = vmatprep.subr.mxu0 0.0
    %38 = vmatpush1.msra.mxu0 0.0
    %39 = vmatprep.subr.mxu0 0.0
    %40 = vmatpush1.msra.mxu0 0.0
    %41 = vmatprep.subr.mxu0 0.0
    %42 = vmatpush1.msra.mxu0 0.0
    %43 = vmatprep.subr.mxu0 0.0
    %44 = vmatpush1.msra.mxu0 0.0
    %45 = vmatprep.subr.mxu0 0.0
    %46 = vmatpush1.msra.mxu0 0.0
    %47 = vmatprep.subr.mxu0 0.0
    %48 = vmatpush1.msra.mxu0 0.0
    %49 = vmatprep.subr.mxu0 0.0
    %50 = vmatpush1.msra.mxu0 0.0
    %51 = vmatprep.subr.mxu0 0.0
    %52 = vmatpush1.msra.mxu0 %v16
    %53 = vmatprep.subr.mxu0 0.0
    %54 = vmatpush2.msra.mxu0 0.0
    %55 = vmatprep.subr.mxu0 0.0
    %56 = vmatpush2.msra.mxu0 0.0
    %57 = vmatprep.subr.mxu0 0.0
    %58 = vmatpush2.msra.mxu0 0.0
    %59 = vmatprep.subr.mxu0 0.0
    %60 = vmatpush2.msra.mxu0 0.0
    %61 = vmatprep.subr.mxu0 0.0
    %62 = vmatpush2.msra.mxu0 0.0
    %63 = vmatprep.subr.mxu0 0.0
    %64 = vmatpush2.msra.mxu0 0.0
    %65 = vmatprep.subr.mxu0 0.0
    %66 = vmatpush2.msra.mxu0 0.0
    %67 = vmatprep.subr.mxu0 0.0
    %68 = vmatpush2.msra.mxu0 0.0
    %69 = vmatprep.subr.mxu0 0.0
    %70 = vmatpush2.msra.mxu0 0.0
    %71 = vmatprep.subr.mxu0 0.0
    %72 = vmatpush2.msra.mxu0 0.0
    %73 = vmatprep.subr.mxu0 0.0
    %74 = vmatpush2.msra.mxu0 0.0
    %75 = vmatprep.subr.mxu0 0.0
    %76 = vmatpush2.msra.mxu0 0.0
    %77 = vmatprep.subr.mxu0 0.0
    %78 = vmatpush2.msra.mxu0 0.0
    %79 = vmatprep.subr.mxu0 0.0
    %80 = vmatpush2.msra.mxu0 0.0
    %81 = vmatprep.subr.mxu0 0.0
    %82 = vmatpush2.msra.mxu0 0.0
    %83 = vmatprep.subr.mxu0 0.0
    %84 = vmatpush2.msra.mxu0 0.0
    %85 = vmatprep.mubr.f32.mxu0 0.0
    %86 = vmatmul.mubr.f32.gmra.mxu0 %v19
    %v87 = vpop.f32.mrf.mxu0
    %v88 = vadd.f32 0.0, %v87
    %v89 = vpop.f32.mrf.mxu0
    %90 = vdwg.mxu0
    %v91 = vmax.f32 %v88, 0.0
    %v92 = vld [vmem:[%s2] sm:$0xff]
    %v93 = vld [vmem:[%s2 + $0x8] sm:$0xff]
    %v94 = vld [vmem:[%s2 + $0x10] sm:$0xff]
    %v95 = vld [vmem:[%s2 + $0x18] sm:$0xff]
    %vm96 = vcmask 261120
    %v98 = vsel %vm96, %v91, 0
    %100 = vmatprep.subr.mxu0 0.0
    %101 = vmatpush1.msra.mxu0 0.0
    %102 = vmatprep.subr.mxu0 0.0
    %103 = vmatpush1.msra.mxu0 0.0
    %104 = vmatprep.subr.mxu0 0.0
    %105 = vmatpush1.msra.mxu0 0.0
    %106 = vmatprep.subr.mxu0 0.0
    %107 = vmatpush1.msra.mxu0 0.0
    %108 = vmatprep.subr.mxu0 0.0
    %109 = vmatpush1.msra.mxu0 0.0
    %110 = vmatprep.subr.mxu0 0.0
    %111 = vmatpush1.msra.mxu0 0.0
    %112 = vmatprep.subr.mxu0 0.0
    %113 = vmatpush1.msra.mxu0 0.0
    %114 = vmatprep.subr.mxu0 0.0
    %115 = vmatpush1.msra.mxu0 0.0
    %116 = vmatprep.subr.mxu0 0.0
    %117 = vmatpush1.msra.mxu0 0.0
    %118 = vmatprep.subr.mxu0 0.0
    %119 = vmatpush1.msra.mxu0 0.0
    %120 = vmatprep.subr.mxu0 0.0
    %121 = vmatpush1.msra.mxu0 0.0
    %122 = vmatprep.subr.mxu0 0.0
    %123 = vmatpush1.msra.mxu0 0.0
    %124 = vmatprep.subr.mxu0 0.0
    %125 = vmatpush1.msra.mxu0 %v95
    %126 = vmatprep.subr.mxu0 0.0
    %127 = vmatpush1.msra.mxu0 %v94
    %128 = vmatprep.subr.mxu0 0.0
    %129 = vmatpush1.msra.mxu0 %v93
    %130 = vmatprep.subr.mxu0 0.0
    %131 = vmatpush1.msra.mxu0 %v92
    %132 = vmatprep.subr.mxu0 0.0
    %133 = vmatpush2.msra.mxu0 0.0
    %134 = vmatprep.subr.mxu0 0.0
    %135 = vmatpush2.msra.mxu0 0.0
    %136 = vmatprep.subr.mxu0 0.0
    %137 = vmatpush2.msra.mxu0 0.0
    %138 = vmatprep.subr.mxu0 0.0
    %139 = vmatpush2.msra.mxu0 0.0
    %140 = vmatprep.subr.mxu0 0.0
    %141 = vmatpush2.msra.mxu0 0.0
    %142 = vmatprep.subr.mxu0 0.0
    %143 = vmatpush2.msra.mxu0 0.0
    %144 = vmatprep.subr.mxu0 0.0
    %145 = vmatpush2.msra.mxu0 0.0
    %146 = vmatprep.subr.mxu0 0.0
    %147 = vmatpush2.msra.mxu0 0.0
    %148 = vmatprep.subr.mxu0 0.0
    %149 = vmatpush2.msra.mxu0 0.0
    %150 = vmatprep.subr.mxu0 0.0
    %151 = vmatpush2.msra.mxu0 0.0
    %152 = vmatprep.subr.mxu0 0.0
    %153 = vmatpush2.msra.mxu0 0.0
    %154 = vmatprep.subr.mxu0 0.0
    %155 = vmatpush2.msra.mxu0 0.0
    %156 = vmatprep.subr.mxu0 0.0
    %157 = vmatpush2.msra.mxu0 0.0
    %158 = vmatprep.subr.mxu0 0.0
    %159 = vmatpush2.msra.mxu0 0.0
    %160 = vmatprep.subr.mxu0 0.0
    %161 = vmatpush2.msra.mxu0 0.0
    %162 = vmatprep.subr.mxu0 0.0
    %163 = vmatpush2.msra.mxu0 0.0
    %164 = vmatprep.mubr.f32.mxu0 0.0
    %165 = vmatmul.mubr.f32.gmra.mxu0 %v98
    %v166 = vpop.f32.mrf.mxu0
    %v167 = vadd.f32 0.0, %v166
    %v168 = vpop.f32.mrf.mxu0
    %169 = vdwg.mxu0
    %v170 = vtanh.pop %v167
    %vm171 = vcmask 25600
    %172 = vst.msk [vmem:[#allocation2] sm:$0x3] %vm171, %v170
    // Predicated region
    $region14: #{neural_network_forward.1} parent=1 // pred_check
      _
    $region15: #{neural_network_forward.1} parent=1 // pred_check_branch
      %174 = sbr.rel (0) target = $region17
    $region16: #{neural_network_forward.1} parent=1 // pred_region
      %s176 = ssub.s32 32, 32
      %177 = vsyncadd [#allocation3], %s176
      %s179 = sshll.u32 [#allocation2], 4
      %s180 = int_to_ptr.vmem [resolvable:$true] %s179
      %182 = dma.vmem_to_hbm [thread:$0]  %s180, 32, %s3, [#allocation3]
    $region17: #{neural_network_forward.1} parent=1 // pred_fallthru
      _
    // Predicated region
    $region18: #{neural_network_forward.1} parent=1 // pred_check
      _
    $region19: #{neural_network_forward.1} parent=1 // pred_check_branch
      %184 = sbr.rel (0) target = $region21
    $region20: #{neural_network_forward.1} parent=1 // pred_region
      %185 = dma.done [#allocation3], 32
    $region21: #{neural_network_forward.1} parent=1 // pred_fallthru
      _
    %186 = vsyncpa [#allocation3], 1

</llo_original>
